<compile_context>
chip_gen: v7x
topology: tpu7x:2x2x1
jax: 0.10.0
libtpu: 0.0.40
codegen_flags: <defaults>
</compile_context>

<pallas_src>
import functools

import jax
import jax.numpy as jnp
from jax.experimental import pallas as pl
from jax.experimental.pallas import tpu as pltpu


def _round_up(x, m):
    return (x + m - 1) // m * m


def _sparse_topk_kernel(x_ref, y_ref, vals_ref, idx_ref,
                        xn_ref, accv_ref, acci_ref, *,
                        k, inv_tau, ny, ny_tile, num_ny_chunks):
    """One (batch_block, nx_block, ny_chunk) step.

    x_ref:   (Bb, Nxb, C)   y_ref: (Bb, T, C)
    vals_ref/idx_ref: (Bb, Nxb, K) outputs (written on the last ny chunk)
    xn_ref:  (Bb, Nxb, C)   cached normalized & 1/tau-scaled x
    accv_ref/acci_ref: (Bb, Nxb, K) running top-k values / global column indices
    """
    yj = pl.program_id(2)
    eps = jnp.float32(1e-12)          # == F.normalize eps
    one = jnp.float32(1.0)
    neg_inf = jnp.float32(-jnp.inf)

    @pl.when(yj == 0)
    def _init():
        x = x_ref[...]
        # sqrt + one exact divide per row (matches F.normalize numerics); fold
        # 1/tau into the row scale -> saves a full (Nx, Ny) divide later.
        xnorm = jnp.sqrt(jnp.sum(x * x, axis=-1, keepdims=True))
        xn_ref[...] = x * (jnp.float32(inv_tau) / jnp.maximum(xnorm, eps))
        accv_ref[...] = jnp.full(accv_ref.shape, neg_inf, jnp.float32)
        acci_ref[...] = jnp.full(acci_ref.shape, -1, jnp.int32)

    # Normalize this ny chunk of y (no tau here; tau already folded into x).
    y = y_ref[...]
    ynorm = jnp.sqrt(jnp.sum(y * y, axis=-1, keepdims=True))
    yn = y * (one / jnp.maximum(ynorm, eps))
    xn = xn_ref[...]

    # (Bb, Nxb, T) similarity tile on the MXU.  Kept in f32 so top-k tie
    # ordering matches the f32 reference (bf16 would be faster on v6e/v7x but
    # can flip near-ties).
    sim = jax.lax.dot_general(
        xn, yn, (((2,), (2,)), ((0,), (0,))),
        preferred_element_type=jnp.float32)

    bb, nxb, t = sim.shape
    col_ids = yj * ny_tile + jax.lax.broadcasted_iota(jnp.int32, (bb, nxb, t), 2)
    if ny % ny_tile != 0:
        # Mask padded columns (only present in the last chunk).
        sim = jnp.where(col_ids < ny, sim, neg_inf)

    # Merge running top-k with this chunk's candidates.
    cand_v = jnp.concatenate([accv_ref[...], sim], axis=-1)      # (Bb,Nxb,K+T)
    cand_i = jnp.concatenate([acci_ref[...], col_ids], axis=-1)  # (Bb,Nxb,K+T)

    # Hoisted out of the selection loop (JAX does not CSE broadcasts).
    k_iota = jax.lax.broadcasted_iota(jnp.int32, (bb, nxb, k), 2)
    big = jnp.int32(jnp.iinfo(jnp.int32).max)

    def select_body(j, carry):
        cv, out_v, out_i = carry
        m = jnp.max(cv, axis=-1, keepdims=True)                          # (Bb,Nxb,1)
        # tie-break: smallest global column index (matches lax.top_k / torch)
        sel = jnp.min(jnp.where(cv == m, cand_i, big),
                      axis=-1, keepdims=True)                            # (Bb,Nxb,1)
        hit = k_iota == j
        out_v = jnp.where(hit, m, out_v)
        out_i = jnp.where(hit, sel, out_i)
        cv = jnp.where(cand_i == sel, neg_inf, cv)
        return cv, out_v, out_i

    init_v = jnp.zeros((bb, nxb, k), jnp.float32)
    init_i = jnp.zeros((bb, nxb, k), jnp.int32)
    _, top_v, top_i = jax.lax.fori_loop(0, k, select_body,
                                        (cand_v, init_v, init_i))

    if num_ny_chunks > 1:
        @pl.when(yj < num_ny_chunks - 1)
        def _carry():
            accv_ref[...] = top_v
            acci_ref[...] = top_i

    @pl.when(yj == num_ny_chunks - 1)
    def _finalize():
        vmax = jnp.max(top_v, axis=-1, keepdims=True)
        e = jnp.exp(top_v - vmax)
        denom = jnp.sum(e, axis=-1, keepdims=True)
        # Exact divide (one per output row).  The approximate EUP reciprocal
        # saved nothing measurable here and broke tight value comparisons.
        vals_ref[...] = e * (one / denom)
        idx_ref[...] = top_i


def _sparse_topk_pallas(fx, fy, *, tau, k, ny_tile=None, nx_block=None,
                        batch_block=None):
    b, n_x, c = fx.shape
    n_y = fy.shape[1]

    # --- tile sizing (half-size tiles on v7x can be requested via ny_tile/nx_block) ---
    nx_pad = _round_up(n_x, 8)
    nxb = 1024 if nx_block is None else nx_block
    nxb = _round_up(min(nxb, nx_pad), 8)
    nx_pad = _round_up(nx_pad, nxb)

    tile = 512 if ny_tile is None else ny_tile
    tile = _round_up(min(tile, _round_up(n_y, 8)), 8)
    ny_pad = _round_up(n_y, tile)
    num_ny_chunks = ny_pad // tile

    # Pack several batch elements per step while the tile is small
    # (amortizes per-grid-step overhead at small point counts).
    if batch_block is None:
        bb = max(1, (1 << 20) // max(1, nxb * tile))
    else:
        bb = batch_block
    bb = max(1, min(bb, b))
    while b % bb:
        bb -= 1

    if nx_pad != n_x:
        fx = jnp.pad(fx, ((0, 0), (0, nx_pad - n_x), (0, 0)))
    if ny_pad != n_y:
        fy = jnp.pad(fy, ((0, 0), (0, ny_pad - n_y), (0, 0)))

    kernel = functools.partial(
        _sparse_topk_kernel, k=k, inv_tau=1.0 / float(tau),
        ny=n_y, ny_tile=tile, num_ny_chunks=num_ny_chunks)

    # Rough per-step VMEM estimate (double-buffered in/out + scratch + temps),
    # with headroom; clamped so it is safe on v5e/v6e/v7x (64 MiB physical on v7x).
    est = 4 * bb * nxb * (4 * c + 10 * (tile + k)) + 8 * bb * tile * c
    vmem_limit = int(min(max(2 * est, 32 * 2**20), 48 * 2**20))

    vals, idx = pl.pallas_call(
        kernel,
        out_shape=(
            jax.ShapeDtypeStruct((b, nx_pad, k), jnp.float32),
            jax.ShapeDtypeStruct((b, nx_pad, k), jnp.int32),
        ),
        grid_spec=pltpu.PrefetchScalarGridSpec(
            num_scalar_prefetch=0,
            grid=(b // bb, nx_pad // nxb, num_ny_chunks),
            in_specs=[
                pl.BlockSpec((bb, nxb, c), lambda bi, xi, yj: (bi, xi, 0)),
                pl.BlockSpec((bb, tile, c), lambda bi, xi, yj: (bi, yj, 0)),
            ],
            out_specs=[
                pl.BlockSpec((bb, nxb, k), lambda bi, xi, yj: (bi, xi, 0)),
                pl.BlockSpec((bb, nxb, k), lambda bi, xi, yj: (bi, xi, 0)),
            ],
            scratch_shapes=[
                pltpu.VMEM((bb, nxb, c), jnp.float32),   # normalized, 1/tau-scaled x
                pltpu.VMEM((bb, nxb, k), jnp.float32),   # running top-k values
                pltpu.VMEM((bb, nxb, k), jnp.int32),     # running top-k indices
            ],
        ),
        compiler_params=pltpu.CompilerParams(
            dimension_semantics=("parallel", "parallel", "arbitrary"),
            vmem_limit_bytes=vmem_limit),
    )(fx, fy)

    return vals[:, :n_x, :], idx[:, :n_x, :]


def sparse_similarity(feat_x, feat_y, *, tau=0.2, k_neighbors=15,
                      ny_tile=None, nx_block=None, batch_block=None):
    """Returns (indices, values, dense_shape) mimicking the COO sparse tensor.

    indices: (3, B*Nx*K) int32  rows = (batch, row, col)
    values:  (B*Nx*K,)   float32 softmax weights
    """
    fx = jnp.asarray(feat_x, jnp.float32)
    fy = jnp.asarray(feat_y, jnp.float32)
    b, n_x, c = fx.shape
    n_y = fy.shape[1]
    k = int(k_neighbors)

    if n_y <= k:
        # Degenerate branch of the torch module (identity indices, softmax over
        # all Ny columns).  Tiny problem size -> plain JAX, no kernel needed.
        xn = fx / jnp.maximum(jnp.linalg.norm(fx, axis=-1, keepdims=True), 1e-12)
        yn = fy / jnp.maximum(jnp.linalg.norm(fy, axis=-1, keepdims=True), 1e-12)
        sim = jnp.einsum("bxc,byc->bxy", xn, yn,
                         precision=jax.lax.Precision.HIGHEST) / tau
        vals = jax.nn.softmax(sim, axis=-1)
        idx = jnp.broadcast_to(jnp.arange(n_y, dtype=jnp.int32), (b, n_x, n_y))
        kk = n_y
    else:
        vals, idx = _sparse_topk_pallas(fx, fy, tau=tau, k=k, ny_tile=ny_tile,
                                        nx_block=nx_block, batch_block=batch_block)
        kk = k

    # Glue (plain JAX): assemble COO indices / values like the torch module.
    batch_idx = jnp.repeat(jnp.arange(b, dtype=jnp.int32), n_x * kk)
    row_idx = jnp.tile(jnp.repeat(jnp.arange(n_x, dtype=jnp.int32), kk), b)
    col_idx = idx.reshape(-1)
    indices = jnp.stack([batch_idx, row_idx, col_idx], axis=0)
    values = vals.reshape(-1)
    return indices, values, (b, n_x, n_y)
    # TODO(synk): hard=True one-hot conversion and the precomputed-similarity
    # (feat_y is None) path are not implemented (defaults use hard=False).


def _reference(feat_x, feat_y, tau, k):
    """Plain-JAX reference for sanity checks (HIGHEST precision so the XLA
    matmul is numerically comparable to the kernel's f32 MXU matmul)."""
    eps = 1e-12
    xn = feat_x / jnp.maximum(jnp.linalg.norm(feat_x, axis=-1, keepdims=True), eps)
    yn = feat_y / jnp.maximum(jnp.linalg.norm(feat_y, axis=-1, keepdims=True), eps)
    sim = jnp.einsum("bxc,byc->bxy", xn, yn,
                     precision=jax.lax.Precision.HIGHEST) / tau
    tv, ti = jax.lax.top_k(sim, k)
    return sim, ti, jax.nn.softmax(tv, axis=-1)


def _check(indices, values, ref_sim, ref_idx, ref_vals, b, nx, ny, k):
    got_vals = values.reshape(b, nx, k)
    got_idx = indices[2].reshape(b, nx, k)

    # Column indices must be valid (no accumulator sentinels leaking through).
    assert bool(jnp.all((got_idx >= 0) & (got_idx < ny))), "invalid column index"

    # (1) softmax consistency: recompute the softmax over the kernel's OWN
    # selected columns from the high-precision reference similarity.
    sim_at_got = jnp.take_along_axis(ref_sim, got_idx, axis=-1)
    vals_at_got = jax.nn.softmax(sim_at_got, axis=-1)
    assert jnp.allclose(got_vals, vals_at_got, atol=2e-3, rtol=2e-2), "values mismatch"
    assert jnp.allclose(jnp.sum(got_vals, axis=-1), 1.0, atol=1e-3), "softmax not normalized"

    # (2) tie/precision-tolerant top-k check: selected columns must have the
    # same similarity (up to fp noise) as the reference selection, position
    # by position (both are sorted descending).
    ref_s = jnp.take_along_axis(ref_sim, ref_idx, axis=-1)
    assert jnp.allclose(sim_at_got, ref_s, atol=5e-3, rtol=1e-3), "indices mismatch"

    # (3) softmax weights vs the reference weights (loose: tolerates near-tie
    # swaps and precision-mode differences, still catches structural bugs).
    assert jnp.allclose(got_vals, ref_vals, atol=5e-3, rtol=5e-2), "values vs reference mismatch"

    # (4) batch / row coordinates of the COO assembly.
    assert bool(jnp.all(indices[0].reshape(b, nx, k)
                        == jnp.arange(b, dtype=jnp.int32)[:, None, None]))
    assert bool(jnp.all(indices[1].reshape(b, nx, k)
                        == jnp.arange(nx, dtype=jnp.int32)[None, :, None]))


if __name__ == "__main__":
    key = jax.random.PRNGKey(0)
    kx, ky = jax.random.split(key)
    B, NX, NY, C = 2, 32, 48, 16
    TAU, K = 0.2, 15  # module defaults

    feat_x = jax.random.normal(kx, (B, NX, C), dtype=jnp.float32)
    feat_y = jax.random.normal(ky, (B, NY, C), dtype=jnp.float32)

    ref_sim, ref_idx, ref_vals = _reference(feat_x, feat_y, TAU, K)

    # Config 1: default tiling (single Ny chunk, both batch elements per step).
    idx1, val1, shape1 = sparse_similarity(feat_x, feat_y, tau=TAU, k_neighbors=K)
    jax.block_until_ready((idx1, val1))
    _check(idx1, val1, ref_sim, ref_idx, ref_vals, B, NX, NY, K)
    assert shape1 == (B, NX, NY)

    # Config 2: force the tiled path (3 Ny chunks, 2 Nx blocks) to exercise the
    # online top-k merge across chunks.
    idx2, val2, _ = sparse_similarity(feat_x, feat_y, tau=TAU, k_neighbors=K,
                                      ny_tile=16, nx_block=16, batch_block=1)
    jax.block_until_ready((idx2, val2))
    _check(idx2, val2, ref_sim, ref_idx, ref_vals, B, NX, NY, K)

    print("KERNEL_OK")
</pallas_src>

<mosaic_0001>
module attributes {stable_mosaic.version = 11 : i64} {
  func.func @_sparse_topk_kernel(%arg0: i32, %arg1: i32, %arg2: i32, %arg3: memref<2x32x16xf32, #tpu.memory_space<vmem>>, %arg4: memref<2x48x16xf32, #tpu.memory_space<vmem>>, %arg5: memref<2x32x15xf32, #tpu.memory_space<vmem>>, %arg6: memref<2x32x15xi32, #tpu.memory_space<vmem>>, %arg7: memref<2x32x16xf32, #tpu.memory_space<vmem>>, %arg8: memref<2x32x15xf32, #tpu.memory_space<vmem>>, %arg9: memref<2x32x15xi32, #tpu.memory_space<vmem>>) attributes {dimension_semantics = [#tpu.dimension_semantics<parallel>, #tpu.dimension_semantics<parallel>, #tpu.dimension_semantics<arbitrary>], iteration_bounds = array<i64: 1, 1, 1>, scalar_prefetch = 0 : i64, scratch_operands = 3 : i64, tpu.core_type = #tpu.core_type<tc>, window_params = [{transform_indices = @transform_0, window_bounds = array<i64: 2, 32, 16>}, {transform_indices = @transform_1, window_bounds = array<i64: 2, 48, 16>}, {transform_indices = @transform_2, window_bounds = array<i64: 2, 32, 15>}, {transform_indices = @transform_3, window_bounds = array<i64: 2, 32, 15>}]} {
    %c0_i32 = arith.constant 0 : i32
    %0 = arith.cmpi eq, %arg2, %c0_i32 : i32
    %1 = arith.extui %0 : i1 to i32
    %cst = arith.constant 9.99999996E-13 : f32
    %cst_0 = arith.constant 0xFF800000 : f32
    %c0_i32_1 = arith.constant 0 : i32
    %2 = arith.cmpi ne, %1, %c0_i32_1 : i32
    scf.if %2 {
      %c0_25 = arith.constant 0 : index
      %c0_26 = arith.constant 0 : index
      %c0_27 = arith.constant 0 : index
      %32 = vector.load %arg3[%c0_25, %c0_26, %c0_27] : memref<2x32x16xf32, #tpu.memory_space<vmem>>, vector<2x32x16xf32>
      %33 = arith.mulf %32, %32 : vector<2x32x16xf32>
      %cst_28 = arith.constant dense<0.000000e+00> : vector<2x32xf32>
      %34 = vector.multi_reduction <add>, %33, %cst_28 [2] : vector<2x32x16xf32> to vector<2x32xf32>
      %35 = vector.shape_cast %34 : vector<2x32xf32> to vector<2x32x1xf32>
      %36 = math.sqrt %35 : vector<2x32x1xf32>
      %37 = vector.broadcast %cst : f32 to vector<2x32x1xf32>
      %38 = arith.maximumf %36, %37 : vector<2x32x1xf32>
      %cst_29 = arith.constant 5.000000e+00 : f32
      %39 = vector.broadcast %cst_29 : f32 to vector<2x32x1xf32>
      %40 = arith.divf %39, %38 : vector<2x32x1xf32>
      %41 = vector.broadcast %40 : vector<2x32x1xf32> to vector<2x32x16xf32>
      %42 = arith.mulf %32, %41 : vector<2x32x16xf32>
      %c0_30 = arith.constant 0 : index
      %c0_31 = arith.constant 0 : index
      %c0_32 = arith.constant 0 : index
      %43 = vector.load %arg7[%c0_30, %c0_31, %c0_32] : memref<2x32x16xf32, #tpu.memory_space<vmem>>, vector<2x32x16xf32>
      tpu.vector_store %arg7[%c0_30, %c0_31, %c0_32], %42 {strides = array<i32>} : memref<2x32x16xf32, #tpu.memory_space<vmem>>, vector<2x32x16xf32>,
      %44 = vector.broadcast %cst_0 : f32 to vector<2x32x15xf32>
      %c0_33 = arith.constant 0 : index
      %c0_34 = arith.constant 0 : index
      %c0_35 = arith.constant 0 : index
      %45 = vector.load %arg8[%c0_33, %c0_34, %c0_35] : memref<2x32x15xf32, #tpu.memory_space<vmem>>, vector<2x32x15xf32>
      tpu.vector_store %arg8[%c0_33, %c0_34, %c0_35], %44 {strides = array<i32>} : memref<2x32x15xf32, #tpu.memory_space<vmem>>, vector<2x32x15xf32>,
      %c-1_i32 = arith.constant -1 : i32
      %46 = vector.broadcast %c-1_i32 : i32 to vector<2x32x15xi32>
      %c0_36 = arith.constant 0 : index
      %c0_37 = arith.constant 0 : index
      %c0_38 = arith.constant 0 : index
      %47 = vector.load %arg9[%c0_36, %c0_37, %c0_38] : memref<2x32x15xi32, #tpu.memory_space<vmem>>, vector<2x32x15xi32>
      tpu.vector_store %arg9[%c0_36, %c0_37, %c0_38], %46 {strides = array<i32>} : memref<2x32x15xi32, #tpu.memory_space<vmem>>, vector<2x32x15xi32>,
    } else {
    }
    %c0 = arith.constant 0 : index
    %c0_2 = arith.constant 0 : index
    %c0_3 = arith.constant 0 : index
    %3 = vector.load %arg4[%c0, %c0_2, %c0_3] : memref<2x48x16xf32, #tpu.memory_space<vmem>>, vector<2x48x16xf32>
    %4 = arith.mulf %3, %3 : vector<2x48x16xf32>
    %cst_4 = arith.constant dense<0.000000e+00> : vector<2x48xf32>
    %5 = vector.multi_reduction <add>, %4, %cst_4 [2] : vector<2x48x16xf32> to vector<2x48xf32>
    %6 = vector.shape_cast %5 : vector<2x48xf32> to vector<2x48x1xf32>
    %7 = math.sqrt %6 : vector<2x48x1xf32>
    %cst_5 = arith.constant 9.99999996E-13 : f32
    %8 = vector.broadcast %cst_5 : f32 to vector<2x48x1xf32>
    %9 = arith.maximumf %7, %8 : vector<2x48x1xf32>
    %cst_6 = arith.constant 1.000000e+00 : f32
    %10 = vector.broadcast %cst_6 : f32 to vector<2x48x1xf32>
    %11 = arith.divf %10, %9 : vector<2x48x1xf32>
    %12 = vector.broadcast %11 : vector<2x48x1xf32> to vector<2x48x16xf32>
    %13 = arith.mulf %3, %12 : vector<2x48x16xf32>
    %c0_7 = arith.constant 0 : index
    %c0_8 = arith.constant 0 : index
    %c0_9 = arith.constant 0 : index
    %14 = vector.load %arg7[%c0_7, %c0_8, %c0_9] : memref<2x32x16xf32, #tpu.memory_space<vmem>>, vector<2x32x16xf32>
    %cst_10 = arith.constant dense<0.000000e+00> : vector<2x32x48xf32>
    %15 = tpu.matmul %14, %13, %cst_10 {dimension_numbers = #tpu.dot_dimension_numbers<[2], [2], [1], [1], [0, 0, 0, 1, 1, 1], [0], [0]>} : vector<2x32x16xf32>, vector<2x48x16xf32>, vector<2x32x48xf32> -> vector<2x32x48xf32>
    %c48_i32 = arith.constant 48 : i32
    %16 = arith.muli %arg2, %c48_i32 : i32
    %17 = tpu.iota {dimensions = array<i32: 2>} : vector<2x32x48xi32>
    %18 = vector.broadcast %16 : i32 to vector<2x32x48xi32>
    %19 = arith.addi %18, %17 : vector<2x32x48xi32>
    %c0_11 = arith.constant 0 : index
    %c0_12 = arith.constant 0 : index
    %c0_13 = arith.constant 0 : index
    %20 = vector.load %arg8[%c0_11, %c0_12, %c0_13] : memref<2x32x15xf32, #tpu.memory_space<vmem>>, vector<2x32x15xf32>
    %21 = tpu.concatenate %20, %15 in 2 : vector<2x32x15xf32>, vector<2x32x48xf32> -> vector<2x32x63xf32>
    %c0_14 = arith.constant 0 : index
    %c0_15 = arith.constant 0 : index
    %c0_16 = arith.constant 0 : index
    %22 = vector.load %arg9[%c0_14, %c0_15, %c0_16] : memref<2x32x15xi32, #tpu.memory_space<vmem>>, vector<2x32x15xi32>
    %23 = tpu.concatenate %22, %19 in 2 : vector<2x32x15xi32>, vector<2x32x48xi32> -> vector<2x32x63xi32>
    %24 = tpu.iota {dimensions = array<i32: 2>} : vector<2x32x15xi32>
    %cst_17 = arith.constant 0.000000e+00 : f32
    %25 = vector.broadcast %cst_17 : f32 to vector<2x32x15xf32>
    %c0_i32_18 = arith.constant 0 : i32
    %26 = vector.broadcast %c0_i32_18 : i32 to vector<2x32x15xi32>
    %c2147483647_i32 = arith.constant 2147483647 : i32
    %cst_19 = arith.constant 0xFF800000 : f32
    %c0_i32_20 = arith.constant 0 : i32
    %c15_i32 = arith.constant 15 : i32
    %27 = arith.addi %c0_i32_20, %c15_i32 : i32
    %c1_i32 = arith.constant 1 : i32
    %28:3 = scf.for %arg10 = %c0_i32_20 to %27 step %c1_i32 iter_args(%arg11 = %21, %arg12 = %25, %arg13 = %26) -> (vector<2x32x63xf32>, vector<2x32x15xf32>, vector<2x32x15xi32>)  : i32 {
      %cst_25 = arith.constant dense<0xFF800000> : vector<2x32xf32>
      %32 = vector.multi_reduction <maximumf>, %arg11, %cst_25 [2] : vector<2x32x63xf32> to vector<2x32xf32>
      %33 = vector.shape_cast %32 : vector<2x32xf32> to vector<2x32x1xf32>
      %34 = vector.broadcast %33 : vector<2x32x1xf32> to vector<2x32x63xf32>
      %35 = arith.cmpf oeq, %arg11, %34 : vector<2x32x63xf32>
      %36 = vector.broadcast %c2147483647_i32 : i32 to vector<2x32x63xi32>
      %37 = arith.select %35, %23, %36 : vector<2x32x63xi1>, vector<2x32x63xi32>
      %cst_26 = arith.constant dense<2147483647> : vector<2x32xi32>
      %38 = vector.multi_reduction <minsi>, %37, %cst_26 [2] : vector<2x32x63xi32> to vector<2x32xi32>
      %39 = vector.shape_cast %38 : vector<2x32xi32> to vector<2x32x1xi32>
      %40 = vector.broadcast %arg10 : i32 to vector<2x32x15xi32>
      %41 = arith.cmpi eq, %24, %40 : vector<2x32x15xi32>
      %42 = vector.shape_cast %33 : vector<2x32x1xf32> to vector<2x32x1xf32>
      %43 = vector.broadcast %42 : vector<2x32x1xf32> to vector<2x32x15xf32>
      %44 = arith.select %41, %43, %arg12 : vector<2x32x15xi1>, vector<2x32x15xf32>
      %45 = vector.shape_cast %39 : vector<2x32x1xi32> to vector<2x32x1xi32>
      %46 = vector.broadcast %45 : vector<2x32x1xi32> to vector<2x32x15xi32>
      %47 = arith.select %41, %46, %arg13 : vector<2x32x15xi1>, vector<2x32x15xi32>
      %48 = vector.broadcast %39 : vector<2x32x1xi32> to vector<2x32x63xi32>
      %49 = arith.cmpi eq, %23, %48 : vector<2x32x63xi32>
      %50 = vector.broadcast %cst_19 : f32 to vector<2x32x63xf32>
      %51 = arith.select %49, %50, %arg11 : vector<2x32x63xi1>, vector<2x32x63xf32>
      scf.yield %51, %44, %47 : vector<2x32x63xf32>, vector<2x32x15xf32>, vector<2x32x15xi32>
    }
    %c15_i32_21 = arith.constant 15 : i32
    %c0_i32_22 = arith.constant 0 : i32
    %29 = arith.cmpi eq, %arg2, %c0_i32_22 : i32
    %30 = arith.extui %29 : i1 to i32
    %cst_23 = arith.constant 1.000000e+00 : f32
    %c0_i32_24 = arith.constant 0 : i32
    %31 = arith.cmpi ne, %30, %c0_i32_24 : i32
    scf.if %31 {
      %cst_25 = arith.constant dense<0xFF800000> : vector<2x32xf32>
      %32 = vector.multi_reduction <maximumf>, %28#1, %cst_25 [2] : vector<2x32x15xf32> to vector<2x32xf32>
      %33 = vector.shape_cast %32 : vector<2x32xf32> to vector<2x32x1xf32>
      %34 = vector.broadcast %33 : vector<2x32x1xf32> to vector<2x32x15xf32>
      %35 = arith.subf %28#1, %34 : vector<2x32x15xf32>
      %36 = math.exp %35 : vector<2x32x15xf32>
      %cst_26 = arith.constant dense<0.000000e+00> : vector<2x32xf32>
      %37 = vector.multi_reduction <add>, %36, %cst_26 [2] : vector<2x32x15xf32> to vector<2x32xf32>
      %38 = vector.shape_cast %37 : vector<2x32xf32> to vector<2x32x1xf32>
      %39 = vector.broadcast %cst_23 : f32 to vector<2x32x1xf32>
      %40 = arith.divf %39, %38 : vector<2x32x1xf32>
      %41 = vector.broadcast %40 : vector<2x32x1xf32> to vector<2x32x15xf32>
      %42 = arith.mulf %36, %41 : vector<2x32x15xf32>
      %c0_27 = arith.constant 0 : index
      %c0_28 = arith.constant 0 : index
      %c0_29 = arith.constant 0 : index
      %43 = vector.load %arg5[%c0_27, %c0_28, %c0_29] : memref<2x32x15xf32, #tpu.memory_space<vmem>>, vector<2x32x15xf32>
      tpu.vector_store %arg5[%c0_27, %c0_28, %c0_29], %42 {strides = array<i32>} : memref<2x32x15xf32, #tpu.memory_space<vmem>>, vector<2x32x15xf32>,
      %c0_30 = arith.constant 0 : index
      %c0_31 = arith.constant 0 : index
      %c0_32 = arith.constant 0 : index
      %44 = vector.load %arg6[%c0_30, %c0_31, %c0_32] : memref<2x32x15xi32, #tpu.memory_space<vmem>>, vector<2x32x15xi32>
      tpu.vector_store %arg6[%c0_30, %c0_31, %c0_32], %28#2 {strides = array<i32>} : memref<2x32x15xi32, #tpu.memory_space<vmem>>, vector<2x32x15xi32>,
    } else {
    }
    return
  }
  func.func @transform_0(%arg0: i32, %arg1: i32, %arg2: i32) -> (i32, i32, i32) {
    %c0_i32 = arith.constant 0 : i32
    %c0_i32_0 = arith.constant 0 : i32
    return %arg0, %arg1, %c0_i32 : i32, i32, i32
  }
  func.func @transform_1(%arg0: i32, %arg1: i32, %arg2: i32) -> (i32, i32, i32) {
    %c0_i32 = arith.constant 0 : i32
    %c0_i32_0 = arith.constant 0 : i32
    return %arg0, %arg2, %c0_i32 : i32, i32, i32
  }
  func.func @transform_2(%arg0: i32, %arg1: i32, %arg2: i32) -> (i32, i32, i32) {
    %c0_i32 = arith.constant 0 : i32
    %c0_i32_0 = arith.constant 0 : i32
    return %arg0, %arg1, %c0_i32 : i32, i32, i32
  }
  func.func @transform_3(%arg0: i32, %arg1: i32, %arg2: i32) -> (i32, i32, i32) {
    %c0_i32 = arith.constant 0 : i32
    %c0_i32_0 = arith.constant 0 : i32
    return %arg0, %arg1, %c0_i32 : i32, i32, i32
  }
}

</mosaic_0001>

<llo_original>
// kernel: tpu_custom_call.1
$region0: #{tpu_custom_call.1}
  #allocation0 [shape = 'u32[]', space=smem, size = 0x4, offset = 0x4, fixed_abs, tag = 'smem constant byte address 0x4 - core index']
  #allocation1 [shape = 'u32[144,128]{1,0:T(1,128)}', space=vmem, size = 0x12000, scoped, tag = 'internal scratch']
  #allocation2 [shape = 'f32[2,32,16]{2,1,0:T(8,128)}', space=vmem, size = 0x8000, scoped, tag = 'scratch operand']
  #allocation3 [shape = 'f32[2,32,15]{2,1,0:T(8,128)}', space=vmem, size = 0x8000, scoped, tag = 'scratch operand']
  #allocation4 [shape = 's32[2,32,15]{2,1,0:T(8,128)}', space=vmem, size = 0x8000, scoped, tag = 'scratch operand']
  %s0 = inlined_call_operand.vmem [shape: f32[2,32,16], index: 0, kind: input, shape index: {}]
  %s1 = inlined_call_operand.vmem [shape: f32[2,48,16], index: 1, kind: input, shape index: {}]
  %s2 = inlined_call_operand.vmem [shape: f32[2,32,15], index: 2, kind: output, shape index: {0}]
  %s3 = inlined_call_operand.vmem [shape: s32[2,32,15], index: 3, kind: output, shape index: {1}]
  %4 = xla_tuple %s2, %s3
  %s5 = sld [smem:[#allocation0]]
  $region41: #{tpu_custom_call.1} parent=0
    _
  %s7 = ssub.s32 1, %s5
  %s8 = scalar_select 0, %s7, %s5
  // Predicated region
  $region2: #{tpu_custom_call.1} parent=0 // pred_check
    _
  $region3: #{tpu_custom_call.1} parent=0 // pred_check_branch
    %10 = sbr.rel (0) target = $region5
  $region4: #{tpu_custom_call.1} parent=0 // pred_region
    _
  $region5: #{tpu_custom_call.1} parent=0 // pred_fallthru
    _
  // Predicated region
  $region6: #{tpu_custom_call.1} parent=0 // pred_check
    _
  $region7: #{tpu_custom_call.1} parent=0 // pred_check_branch
    %12 = sbr.rel (0) target = $region9
  $region8: #{tpu_custom_call.1} parent=0 // pred_region
    _
  $region9: #{tpu_custom_call.1} parent=0 // pred_fallthru
    _
  %p13 = scmp.eq.s32.totalorder 0, 0
  // Predicated region
  $region10: #{tpu_custom_call.1} parent=0 // pred_check
    %p14 = pneg %p13
  $region11: #{tpu_custom_call.1} parent=0 // pred_check_branch
    %16 = sbr.rel (%p14) target = $region13
  $region12: #{tpu_custom_call.1} parent=0 // pred_region
    %v17 = vld [vmem:[%s0] sm:$0xff]
    %v18 = vld [vmem:[%s0 + $0x8] sm:$0xff]
    %v19 = vld [vmem:[%s0 + $0x10] sm:$0xff]
    %v20 = vld [vmem:[%s0 + $0x18] sm:$0xff]
    %v21 = vld [vmem:[%s0 + $0x20] sm:$0xff]
    %v22 = vld [vmem:[%s0 + $0x28] sm:$0xff]
    %v23 = vld [vmem:[%s0 + $0x30] sm:$0xff]
    %v24 = vld [vmem:[%s0 + $0x38] sm:$0xff]
    %v25 = vmul.f32 %v17, %v17
    %v26 = vmul.f32 %v18, %v18
    %v27 = vmul.f32 %v19, %v19
    %v28 = vmul.f32 %v20, %v20
    %v29 = vmul.f32 %v21, %v21
    %v30 = vmul.f32 %v22, %v22
    %v31 = vmul.f32 %v23, %v23
    %v32 = vmul.f32 %v24, %v24
    %vm33 = vcmask 130048
    %v34 = vsel %vm33, %v25, 0.0
    %35 = vadd.xlane.f32.xlu0 %v34
    %v36 = vpop.xlane.xlu0 %35
    %v37 = vsel %vm33, %v26, 0.0
    %38 = vadd.xlane.f32.xlu0 %v37
    %v39 = vpop.xlane.xlu0 %38
    %v40 = vsel %vm33, %v27, 0.0
    %41 = vadd.xlane.f32.xlu0 %v40
    %v42 = vpop.xlane.xlu0 %41
    %v43 = vsel %vm33, %v28, 0.0
    %44 = vadd.xlane.f32.xlu0 %v43
    %v45 = vpop.xlane.xlu0 %44
    %v46 = vsel %vm33, %v29, 0.0
    %47 = vadd.xlane.f32.xlu0 %v46
    %v48 = vpop.xlane.xlu0 %47
    %v49 = vsel %vm33, %v30, 0.0
    %50 = vadd.xlane.f32.xlu0 %v49
    %v51 = vpop.xlane.xlu0 %50
    %v52 = vsel %vm33, %v31, 0.0
    %53 = vadd.xlane.f32.xlu0 %v52
    %v54 = vpop.xlane.xlu0 %53
    %v55 = vsel %vm33, %v32, 0.0
    %56 = vadd.xlane.f32.xlu0 %v55
    %v57 = vpop.xlane.xlu0 %56
    %v58 = vrsqrt.pop %v36
    %v59 = vmul.f32 %v36, %v58
    %vm60 = vcmp.eq.f32.partialorder %v36, inf
    %v61 = vsel %vm60, %v36, %v59
    %vm62 = vcmp.eq.f32.partialorder %v36, 0.0
    %v63 = vand.u32 %v36, 2147483648
    %v64 = vsel %vm62, %v63, %v61
    %v65 = vrsqrt.pop %v39
    %v66 = vmul.f32 %v39, %v65
    %vm67 = vcmp.eq.f32.partialorder %v39, inf
    %v68 = vsel %vm67, %v39, %v66
    %vm69 = vcmp.eq.f32.partialorder %v39, 0.0
    %v70 = vand.u32 %v39, 2147483648
    %v71 = vsel %vm69, %v70, %v68
    %v72 = vrsqrt.pop %v42
    %v73 = vmul.f32 %v42, %v72
    %vm74 = vcmp.eq.f32.partialorder %v42, inf
    %v75 = vsel %vm74, %v42, %v73
    %vm76 = vcmp.eq.f32.partialorder %v42, 0.0
    %v77 = vand.u32 %v42, 2147483648
    %v78 = vsel %vm76, %v77, %v75
    %v79 = vrsqrt.pop %v45
    %v80 = vmul.f32 %v45, %v79
    %vm81 = vcmp.eq.f32.partialorder %v45, inf
    %v82 = vsel %vm81, %v45, %v80
    %vm83 = vcmp.eq.f32.partialorder %v45, 0.0
    %v84 = vand.u32 %v45, 2147483648
    %v85 = vsel %vm83, %v84, %v82
    %v86 = vrsqrt.pop %v48
    %v87 = vmul.f32 %v48, %v86
    %vm88 = vcmp.eq.f32.partialorder %v48, inf
    %v89 = vsel %vm88, %v48, %v87
    %vm90 = vcmp.eq.f32.partialorder %v48, 0.0
    %v91 = vand.u32 %v48, 2147483648
    %v92 = vsel %vm90, %v91, %v89
    %v93 = vrsqrt.pop %v51
    %v94 = vmul.f32 %v51, %v93
    %vm95 = vcmp.eq.f32.partialorder %v51, inf
    %v96 = vsel %vm95, %v51, %v94
    %vm97 = vcmp.eq.f32.partialorder %v51, 0.0
    %v98 = vand.u32 %v51, 2147483648
    %v99 = vsel %vm97, %v98, %v96
    %v100 = vrsqrt.pop %v54
    %v101 = vmul.f32 %v54, %v100
    %vm102 = vcmp.eq.f32.partialorder %v54, inf
    %v103 = vsel %vm102, %v54, %v101
    %vm104 = vcmp.eq.f32.partialorder %v54, 0.0
    %v105 = vand.u32 %v54, 2147483648
    %v106 = vsel %vm104, %v105, %v103
    %v107 = vrsqrt.pop %v57
    %v108 = vmul.f32 %v57, %v107
    %vm109 = vcmp.eq.f32.partialorder %v57, inf
    %v110 = vsel %vm109, %v57, %v108
    %vm111 = vcmp.eq.f32.partialorder %v57, 0.0
    %v112 = vand.u32 %v57, 2147483648
    %v113 = vsel %vm111, %v112, %v110
    %v114 = vmax.f32 %v64, 1e-12
    %v115 = vmax.f32 %v71, 1e-12
    %v116 = vmax.f32 %v78, 1e-12
    %v117 = vmax.f32 %v85, 1e-12
    %v118 = vmax.f32 %v92, 1e-12
    %v119 = vmax.f32 %v99, 1e-12
    %v120 = vmax.f32 %v106, 1e-12
    %v121 = vmax.f32 %v113, 1e-12
    %v122 = vrcp.pop %v114
    %v123 = vmul.f32 5.0, %v122
    %v124 = vrcp.pop %v115
    %v125 = vmul.f32 5.0, %v124
    %v126 = vrcp.pop %v116
    %v127 = vmul.f32 5.0, %v126
    %v128 = vrcp.pop %v117
    %v129 = vmul.f32 5.0, %v128
    %v130 = vrcp.pop %v118
    %v131 = vmul.f32 5.0, %v130
    %v132 = vrcp.pop %v119
    %v133 = vmul.f32 5.0, %v132
    %v134 = vrcp.pop %v120
    %v135 = vmul.f32 5.0, %v134
    %v136 = vrcp.pop %v121
    %v137 = vmul.f32 5.0, %v136
    %v138 = vmul.f32 %v17, %v123
    %v139 = vmul.f32 %v18, %v125
    %v140 = vmul.f32 %v19, %v127
    %v141 = vmul.f32 %v20, %v129
    %v142 = vmul.f32 %v21, %v131
    %v143 = vmul.f32 %v22, %v133
    %v144 = vmul.f32 %v23, %v135
    %v145 = vmul.f32 %v24, %v137
    %146 = vst.msk [vmem:[#allocation2] sm:$0xff] %vm33, %v138
    %147 = vst.msk [vmem:[#allocation2 + $0x8] sm:$0xff] %vm33, %v139
    %148 = vst.msk [vmem:[#allocation2 + $0x10] sm:$0xff] %vm33, %v140
    %149 = vst.msk [vmem:[#allocation2 + $0x18] sm:$0xff] %vm33, %v141
    %150 = vst.msk [vmem:[#allocation2 + $0x20] sm:$0xff] %vm33, %v142
    %151 = vst.msk [vmem:[#allocation2 + $0x28] sm:$0xff] %vm33, %v143
    %152 = vst.msk [vmem:[#allocation2 + $0x30] sm:$0xff] %vm33, %v144
    %153 = vst.msk [vmem:[#allocation2 + $0x38] sm:$0xff] %vm33, %v145
    %vm154 = vcmask 121856
    %155 = vst.msk [vmem:[#allocation3] sm:$0xff] %vm154, -inf
    %156 = vst.msk [vmem:[#allocation3 + $0x8] sm:$0xff] %vm154, -inf
    %157 = vst.msk [vmem:[#allocation3 + $0x10] sm:$0xff] %vm154, -inf
    %158 = vst.msk [vmem:[#allocation3 + $0x18] sm:$0xff] %vm154, -inf
    %159 = vst.msk [vmem:[#allocation3 + $0x20] sm:$0xff] %vm154, -inf
    %160 = vst.msk [vmem:[#allocation3 + $0x28] sm:$0xff] %vm154, -inf
    %161 = vst.msk [vmem:[#allocation3 + $0x30] sm:$0xff] %vm154, -inf
    %162 = vst.msk [vmem:[#allocation3 + $0x38] sm:$0xff] %vm154, -inf
    %163 = vst.msk [vmem:[#allocation4] sm:$0xff] %vm154, 4294967295
    %164 = vst.msk [vmem:[#allocation4 + $0x8] sm:$0xff] %vm154, 4294967295
    %165 = vst.msk [vmem:[#allocation4 + $0x10] sm:$0xff] %vm154, 4294967295
    %166 = vst.msk [vmem:[#allocation4 + $0x18] sm:$0xff] %vm154, 4294967295
    %167 = vst.msk [vmem:[#allocation4 + $0x20] sm:$0xff] %vm154, 4294967295
    %168 = vst.msk [vmem:[#allocation4 + $0x28] sm:$0xff] %vm154, 4294967295
    %169 = vst.msk [vmem:[#allocation4 + $0x30] sm:$0xff] %vm154, 4294967295
    %170 = vst.msk [vmem:[#allocation4 + $0x38] sm:$0xff] %vm154, 4294967295
  $region13: #{tpu_custom_call.1} parent=0 // pred_fallthru
    _
  %v171 = vld [vmem:[%s1] sm:$0xff]
  %v172 = vld [vmem:[%s1 + $0x8] sm:$0xff]
  %v173 = vld [vmem:[%s1 + $0x10] sm:$0xff]
  %v174 = vld [vmem:[%s1 + $0x18] sm:$0xff]
  %v175 = vld [vmem:[%s1 + $0x20] sm:$0xff]
  %v176 = vld [vmem:[%s1 + $0x28] sm:$0xff]
  %v177 = vld [vmem:[%s1 + $0x30] sm:$0xff]
  %v178 = vld [vmem:[%s1 + $0x38] sm:$0xff]
  %v179 = vld [vmem:[%s1 + $0x40] sm:$0xff]
  %v180 = vld [vmem:[%s1 + $0x48] sm:$0xff]
  %v181 = vld [vmem:[%s1 + $0x50] sm:$0xff]
  %v182 = vld [vmem:[%s1 + $0x58] sm:$0xff]
  %v183 = vmul.f32 %v171, %v171
  %v184 = vmul.f32 %v172, %v172
  %v185 = vmul.f32 %v173, %v173
  %v186 = vmul.f32 %v174, %v174
  %v187 = vmul.f32 %v175, %v175
  %v188 = vmul.f32 %v176, %v176
  %v189 = vmul.f32 %v177, %v177
  %v190 = vmul.f32 %v178, %v178
  %v191 = vmul.f32 %v179, %v179
  %v192 = vmul.f32 %v180, %v180
  %v193 = vmul.f32 %v181, %v181
  %v194 = vmul.f32 %v182, %v182
  %vm195 = vcmask 130048
  %v196 = vsel %vm195, %v183, 0.0
  %197 = vadd.xlane.f32.xlu0 %v196
  %v198 = vpop.xlane.xlu0 %197
  %v199 = vsel %vm195, %v184, 0.0
  %200 = vadd.xlane.f32.xlu0 %v199
  %v201 = vpop.xlane.xlu0 %200
  %v202 = vsel %vm195, %v185, 0.0
  %203 = vadd.xlane.f32.xlu0 %v202
  %v204 = vpop.xlane.xlu0 %203
  %v205 = vsel %vm195, %v186, 0.0
  %206 = vadd.xlane.f32.xlu0 %v205
  %v207 = vpop.xlane.xlu0 %206
  %v208 = vsel %vm195, %v187, 0.0
  %209 = vadd.xlane.f32.xlu0 %v208
  %v210 = vpop.xlane.xlu0 %209
  %v211 = vsel %vm195, %v188, 0.0
  %212 = vadd.xlane.f32.xlu0 %v211
  %v213 = vpop.xlane.xlu0 %212
  %v214 = vsel %vm195, %v189, 0.0
  %215 = vadd.xlane.f32.xlu0 %v214
  %v216 = vpop.xlane.xlu0 %215
  %v217 = vsel %vm195, %v190, 0.0
  %218 = vadd.xlane.f32.xlu0 %v217
  %v219 = vpop.xlane.xlu0 %218
  %v220 = vsel %vm195, %v191, 0.0
  %221 = vadd.xlane.f32.xlu0 %v220
  %v222 = vpop.xlane.xlu0 %221
  %v223 = vsel %vm195, %v192, 0.0
  %224 = vadd.xlane.f32.xlu0 %v223
  %v225 = vpop.xlane.xlu0 %224
  %v226 = vsel %vm195, %v193, 0.0
  %227 = vadd.xlane.f32.xlu0 %v226
  %v228 = vpop.xlane.xlu0 %227
  %v229 = vsel %vm195, %v194, 0.0
  %230 = vadd.xlane.f32.xlu0 %v229
  %v231 = vpop.xlane.xlu0 %230
  %v232 = vrsqrt.pop %v198
  %v233 = vmul.f32 %v198, %v232
  %vm234 = vcmp.eq.f32.partialorder %v198, inf
  %v235 = vsel %vm234, %v198, %v233
  %vm236 = vcmp.eq.f32.partialorder %v198, 0.0
  %v237 = vand.u32 %v198, 2147483648
  %v238 = vsel %vm236, %v237, %v235
  %v239 = vrsqrt.pop %v201
  %v240 = vmul.f32 %v201, %v239
  %vm241 = vcmp.eq.f32.partialorder %v201, inf
  %v242 = vsel %vm241, %v201, %v240
  %vm243 = vcmp.eq.f32.partialorder %v201, 0.0
  %v244 = vand.u32 %v201, 2147483648
  %v245 = vsel %vm243, %v244, %v242
  %v246 = vrsqrt.pop %v204
  %v247 = vmul.f32 %v204, %v246
  %vm248 = vcmp.eq.f32.partialorder %v204, inf
  %v249 = vsel %vm248, %v204, %v247
  %vm250 = vcmp.eq.f32.partialorder %v204, 0.0
  %v251 = vand.u32 %v204, 2147483648
  %v252 = vsel %vm250, %v251, %v249
  %v253 = vrsqrt.pop %v207
  %v254 = vmul.f32 %v207, %v253
  %vm255 = vcmp.eq.f32.partialorder %v207, inf
  %v256 = vsel %vm255, %v207, %v254
  %vm257 = vcmp.eq.f32.partialorder %v207, 0.0
  %v258 = vand.u32 %v207, 2147483648
  %v259 = vsel %vm257, %v258, %v256
  %v260 = vrsqrt.pop %v210
  %v261 = vmul.f32 %v210, %v260
  %vm262 = vcmp.eq.f32.partialorder %v210, inf
  %v263 = vsel %vm262, %v210, %v261
  %vm264 = vcmp.eq.f32.partialorder %v210, 0.0
  %v265 = vand.u32 %v210, 2147483648
  %v266 = vsel %vm264, %v265, %v263
  %v267 = vrsqrt.pop %v213
  %v268 = vmul.f32 %v213, %v267
  %vm269 = vcmp.eq.f32.partialorder %v213, inf
  %v270 = vsel %vm269, %v213, %v268
  %vm271 = vcmp.eq.f32.partialorder %v213, 0.0
  %v272 = vand.u32 %v213, 2147483648
  %v273 = vsel %vm271, %v272, %v270
  %v274 = vrsqrt.pop %v216
  %v275 = vmul.f32 %v216, %v274
  %vm276 = vcmp.eq.f32.partialorder %v216, inf
  %v277 = vsel %vm276, %v216, %v275
  %vm278 = vcmp.eq.f32.partialorder %v216, 0.0
  %v279 = vand.u32 %v216, 2147483648
  %v280 = vsel %vm278, %v279, %v277
  %v281 = vrsqrt.pop %v219
  %v282 = vmul.f32 %v219, %v281
  %vm283 = vcmp.eq.f32.partialorder %v219, inf
  %v284 = vsel %vm283, %v219, %v282
  %vm285 = vcmp.eq.f32.partialorder %v219, 0.0
  %v286 = vand.u32 %v219, 2147483648
  %v287 = vsel %vm285, %v286, %v284
  %v288 = vrsqrt.pop %v222
  %v289 = vmul.f32 %v222, %v288
  %vm290 = vcmp.eq.f32.partialorder %v222, inf
  %v291 = vsel %vm290, %v222, %v289
  %vm292 = vcmp.eq.f32.partialorder %v222, 0.0
  %v293 = vand.u32 %v222, 2147483648
  %v294 = vsel %vm292, %v293, %v291
  %v295 = vrsqrt.pop %v225
  %v296 = vmul.f32 %v225, %v295
  %vm297 = vcmp.eq.f32.partialorder %v225, inf
  %v298 = vsel %vm297, %v225, %v296
  %vm299 = vcmp.eq.f32.partialorder %v225, 0.0
  %v300 = vand.u32 %v225, 2147483648
  %v301 = vsel %vm299, %v300, %v298
  %v302 = vrsqrt.pop %v228
  %v303 = vmul.f32 %v228, %v302
  %vm304 = vcmp.eq.f32.partialorder %v228, inf
  %v305 = vsel %vm304, %v228, %v303
  %vm306 = vcmp.eq.f32.partialorder %v228, 0.0
  %v307 = vand.u32 %v228, 2147483648
  %v308 = vsel %vm306, %v307, %v305
  %v309 = vrsqrt.pop %v231
  %v310 = vmul.f32 %v231, %v309
  %vm311 = vcmp.eq.f32.partialorder %v231, inf
  %v312 = vsel %vm311, %v231, %v310
  %vm313 = vcmp.eq.f32.partialorder %v231, 0.0
  %v314 = vand.u32 %v231, 2147483648
  %v315 = vsel %vm313, %v314, %v312
  %v316 = vmax.f32 %v238, 1e-12
  %v317 = vmax.f32 %v245, 1e-12
  %v318 = vmax.f32 %v252, 1e-12
  %v319 = vmax.f32 %v259, 1e-12
  %v320 = vmax.f32 %v266, 1e-12
  %v321 = vmax.f32 %v273, 1e-12
  %v322 = vmax.f32 %v280, 1e-12
  %v323 = vmax.f32 %v287, 1e-12
  %v324 = vmax.f32 %v294, 1e-12
  %v325 = vmax.f32 %v301, 1e-12
  %v326 = vmax.f32 %v308, 1e-12
  %v327 = vmax.f32 %v315, 1e-12
  %v328 = vrcp.pop %v316
  %v329 = vmul.f32 1.0, %v328
  %v330 = vrcp.pop %v317
  %v331 = vmul.f32 1.0, %v330
  %v332 = vrcp.pop %v318
  %v333 = vmul.f32 1.0, %v332
  %v334 = vrcp.pop %v319
  %v335 = vmul.f32 1.0, %v334
  %v336 = vrcp.pop %v320
  %v337 = vmul.f32 1.0, %v336
  %v338 = vrcp.pop %v321
  %v339 = vmul.f32 1.0, %v338
  %v340 = vrcp.pop %v322
  %v341 = vmul.f32 1.0, %v340
  %v342 = vrcp.pop %v323
  %v343 = vmul.f32 1.0, %v342
  %v344 = vrcp.pop %v324
  %v345 = vmul.f32 1.0, %v344
  %v346 = vrcp.pop %v325
  %v347 = vmul.f32 1.0, %v346
  %v348 = vrcp.pop %v326
  %v349 = vmul.f32 1.0, %v348
  %v350 = vrcp.pop %v327
  %v351 = vmul.f32 1.0, %v350
  %v352 = vmul.f32 %v171, %v329
  %v353 = vmul.f32 %v172, %v331
  %v354 = vmul.f32 %v173, %v333
  %v355 = vmul.f32 %v174, %v335
  %v356 = vmul.f32 %v175, %v337
  %v357 = vmul.f32 %v176, %v339
  %v358 = vmul.f32 %v177, %v341
  %v359 = vmul.f32 %v178, %v343
  %v360 = vmul.f32 %v179, %v345
  %v361 = vmul.f32 %v180, %v347
  %v362 = vmul.f32 %v181, %v349
  %v363 = vmul.f32 %v182, %v351
  %v364 = vld [vmem:[#allocation2] sm:$0xff]
  %v365 = vld [vmem:[#allocation2 + $0x8] sm:$0xff]
  %v366 = vld [vmem:[#allocation2 + $0x10] sm:$0xff]
  %v367 = vld [vmem:[#allocation2 + $0x18] sm:$0xff]
  %v368 = vld [vmem:[#allocation2 + $0x20] sm:$0xff]
  %v369 = vld [vmem:[#allocation2 + $0x28] sm:$0xff]
  %v370 = vld [vmem:[#allocation2 + $0x30] sm:$0xff]
  %v371 = vld [vmem:[#allocation2 + $0x38] sm:$0xff]
  %v373 = vsel %vm195, %v364, 0
  %v376 = vsel %vm195, %v365, 0
  %v379 = vsel %vm195, %v366, 0
  %v382 = vsel %vm195, %v367, 0
  %v385 = vsel %vm195, %v352, 0
  %v388 = vsel %vm195, %v353, 0
  %v391 = vsel %vm195, %v354, 0
  %v394 = vsel %vm195, %v355, 0
  %v397 = vsel %vm195, %v356, 0
  %v400 = vsel %vm195, %v357, 0
  %402 = vmatprep.subr.mxu0 0.0
  %403 = vmatpush1.xpose.msra.mxu0 %v385
  %404 = vmatprep.subr.mxu0 0.0
  %405 = vmatpush1.xpose.msra.mxu0 %v388
  %406 = vmatprep.subr.mxu0 0.0
  %407 = vmatpush1.xpose.msra.mxu0 %v391
  %408 = vmatprep.subr.mxu0 0.0
  %409 = vmatpush1.xpose.msra.mxu0 %v394
  %410 = vmatprep.subr.mxu0 0.0
  %411 = vmatpush1.xpose.msra.mxu0 %v397
  %412 = vmatprep.subr.mxu0 0.0
  %413 = vmatpush1.xpose.msra.mxu0 %v400
  %414 = vmatprep.subr.mxu0 0.0
  %415 = vmatpush1.xpose.msra.mxu0 0.0
  %416 = vmatprep.subr.mxu0 0.0
  %417 = vmatpush1.xpose.msra.mxu0 0.0
  %418 = vmatprep.subr.mxu0 0.0
  %419 = vmatpush1.xpose.msra.mxu0 0.0
  %420 = vmatprep.subr.mxu0 0.0
  %421 = vmatpush1.xpose.msra.mxu0 0.0
  %422 = vmatprep.subr.mxu0 0.0
  %423 = vmatpush1.xpose.msra.mxu0 0.0
  %424 = vmatprep.subr.mxu0 0.0
  %425 = vmatpush1.xpose.msra.mxu0 0.0
  %426 = vmatprep.subr.mxu0 0.0
  %427 = vmatpush1.xpose.msra.mxu0 0.0
  %428 = vmatprep.subr.mxu0 0.0
  %429 = vmatpush1.xpose.msra.mxu0 0.0
  %430 = vmatprep.subr.mxu0 0.0
  %431 = vmatpush1.xpose.msra.mxu0 0.0
  %432 = vmatprep.subr.mxu0 0.0
  %433 = vmatpush1.xpose.msra.mxu0 0.0
  %434 = vmatprep.subr.mxu0 0.0
  %435 = vmatpush1.xpose.msra.mxu0 0.0
  %436 = vmatprep.subr.mxu0 0.0
  %437 = vmatpush1.xpose.msra.mxu0 0.0
  %438 = vmatprep.subr.mxu0 0.0
  %439 = vmatpush1.xpose.msra.mxu0 0.0
  %440 = vmatprep.subr.mxu0 0.0
  %441 = vmatpush1.xpose.msra.mxu0 0.0
  %442 = vmatprep.subr.mxu0 0.0
  %443 = vmatpush1.xpose.msra.mxu0 0.0
  %444 = vmatprep.subr.mxu0 0.0
  %445 = vmatpush1.xpose.msra.mxu0 0.0
  %446 = vmatprep.subr.mxu0 0.0
  %447 = vmatpush1.xpose.msra.mxu0 0.0
  %448 = vmatprep.subr.mxu0 0.0
  %449 = vmatpush1.xpose.msra.mxu0 0.0
  %450 = vmatprep.subr.mxu0 0.0
  %451 = vmatpush1.xpose.msra.mxu0 0.0
  %452 = vmatprep.subr.mxu0 0.0
  %453 = vmatpush1.xpose.msra.mxu0 0.0
  %454 = vmatprep.subr.mxu0 0.0
  %455 = vmatpush1.xpose.msra.mxu0 0.0
  %456 = vmatprep.subr.mxu0 0.0
  %457 = vmatpush1.xpose.msra.mxu0 0.0
  %458 = vmatprep.subr.mxu0 0.0
  %459 = vmatpush1.xpose.msra.mxu0 0.0
  %460 = vmatprep.subr.mxu0 0.0
  %461 = vmatpush1.xpose.msra.mxu0 0.0
  %462 = vmatprep.subr.mxu0 0.0
  %463 = vmatpush1.xpose.msra.mxu0 0.0
  %464 = vmatprep.subr.mxu0 0.0
  %465 = vmatpush1.xpose.msra.mxu0 0.0
  %466 = vmatprep.mubr.f32.mxu0 0.0
  %467 = vmatmul.mubr.f32.gmra.mrb[0].mxu0 %v373
  %v468 = vpop.f32.mrb[0].mxu0
  %v469 = vadd.f32 0.0, %v468
  %v470 = vpop.f32.mrb[0].mxu0
  %471 = vmatprep.mubr.f32.mxu0 0.0
  %472 = vmatmul.mubr.f32.gmra.mrb[0].mxu0 %v376
  %v473 = vpop.f32.mrb[0].mxu0
  %v474 = vadd.f32 0.0, %v473
  %v475 = vpop.f32.mrb[0].mxu0
  %476 = vmatprep.mubr.f32.mxu0 0.0
  %477 = vmatmul.mubr.f32.gmra.mrb[0].mxu0 %v379
  %v478 = vpop.f32.mrb[0].mxu0
  %v479 = vadd.f32 0.0, %v478
  %v480 = vpop.f32.mrb[0].mxu0
  %481 = vmatprep.mubr.f32.mxu0 0.0
  %482 = vmatmul.mubr.f32.gmra.mrb[0].mxu0 %v382
  %v483 = vpop.f32.mrb[0].mxu0
  %v484 = vadd.f32 0.0, %v483
  %v485 = vpop.f32.mrb[0].mxu0
  %486 = vdwg.mxu0
  %v488 = vsel %vm195, %v368, 0
  %v491 = vsel %vm195, %v369, 0
  %v494 = vsel %vm195, %v370, 0
  %v497 = vsel %vm195, %v371, 0
  %v500 = vsel %vm195, %v358, 0
  %v503 = vsel %vm195, %v359, 0
  %v506 = vsel %vm195, %v360, 0
  %v509 = vsel %vm195, %v361, 0
  %v512 = vsel %vm195, %v362, 0
  %v515 = vsel %vm195, %v363, 0
  %517 = vmatprep.subr.mxu0 0.0
  %518 = vmatpush1.xpose.msra.mxu0 %v500
  %519 = vmatprep.subr.mxu0 0.0
  %520 = vmatpush1.xpose.msra.mxu0 %v503
  %521 = vmatprep.subr.mxu0 0.0
  %522 = vmatpush1.xpose.msra.mxu0 %v506
  %523 = vmatprep.subr.mxu0 0.0
  %524 = vmatpush1.xpose.msra.mxu0 %v509
  %525 = vmatprep.subr.mxu0 0.0
  %526 = vmatpush1.xpose.msra.mxu0 %v512
  %527 = vmatprep.subr.mxu0 0.0
  %528 = vmatpush1.xpose.msra.mxu0 %v515
  %529 = vmatprep.subr.mxu0 0.0
  %530 = vmatpush1.xpose.msra.mxu0 0.0
  %531 = vmatprep.subr.mxu0 0.0
  %532 = vmatpush1.xpose.msra.mxu0 0.0
  %533 = vmatprep.subr.mxu0 0.0
  %534 = vmatpush1.xpose.msra.mxu0 0.0
  %535 = vmatprep.subr.mxu0 0.0
  %536 = vmatpush1.xpose.msra.mxu0 0.0
  %537 = vmatprep.subr.mxu0 0.0
  %538 = vmatpush1.xpose.msra.mxu0 0.0
  %539 = vmatprep.subr.mxu0 0.0
  %540 = vmatpush1.xpose.msra.mxu0 0.0
  %541 = vmatprep.subr.mxu0 0.0
  %542 = vmatpush1.xpose.msra.mxu0 0.0
  %543 = vmatprep.subr.mxu0 0.0
  %544 = vmatpush1.xpose.msra.mxu0 0.0
  %545 = vmatprep.subr.mxu0 0.0
  %546 = vmatpush1.xpose.msra.mxu0 0.0
  %547 = vmatprep.subr.mxu0 0.0
  %548 = vmatpush1.xpose.msra.mxu0 0.0
  %549 = vmatprep.subr.mxu0 0.0
  %550 = vmatpush1.xpose.msra.mxu0 0.0
  %551 = vmatprep.subr.mxu0 0.0
  %552 = vmatpush1.xpose.msra.mxu0 0.0
  %553 = vmatprep.subr.mxu0 0.0
  %554 = vmatpush1.xpose.msra.mxu0 0.0
  %555 = vmatprep.subr.mxu0 0.0
  %556 = vmatpush1.xpose.msra.mxu0 0.0
  %557 = vmatprep.subr.mxu0 0.0
  %558 = vmatpush1.xpose.msra.mxu0 0.0
  %559 = vmatprep.subr.mxu0 0.0
  %560 = vmatpush1.xpose.msra.mxu0 0.0
  %561 = vmatprep.subr.mxu0 0.0
  %562 = vmatpush1.xpose.msra.mxu0 0.0
  %563 = vmatprep.subr.mxu0 0.0
  %564 = vmatpush1.xpose.msra.mxu0 0.0
  %565 = vmatprep.subr.mxu0 0.0
  %566 = vmatpush1.xpose.msra.mxu0 0.0
  %567 = vmatprep.subr.mxu0 0.0
  %568 = vmatpush1.xpose.msra.mxu0 0.0
  %569 = vmatprep.subr.mxu0 0.0
  %570 = vmatpush1.xpose.msra.mxu0 0.0
  %571 = vmatprep.subr.mxu0 0.0
  %572 = vmatpush1.xpose.msra.mxu0 0.0
  %573 = vmatprep.subr.mxu0 0.0
  %574 = vmatpush1.xpose.msra.mxu0 0.0
  %575 = vmatprep.subr.mxu0 0.0
  %576 = vmatpush1.xpose.msra.mxu0 0.0
  %577 = vmatprep.subr.mxu0 0.0
  %578 = vmatpush1.xpose.msra.mxu0 0.0
  %579 = vmatprep.subr.mxu0 0.0
  %580 = vmatpush1.xpose.msra.mxu0 0.0
  %581 = vmatprep.mubr.f32.mxu0 0.0
  %582 = vmatmul.mubr.f32.gmra.mrb[0].mxu0 %v488
  %v583 = vpop.f32.mrb[0].mxu0
  %v584 = vadd.f32 0.0, %v583
  %v585 = vpop.f32.mrb[0].mxu0
  %586 = vmatprep.mubr.f32.mxu0 0.0
  %587 = vmatmul.mubr.f32.gmra.mrb[0].mxu0 %v491
  %v588 = vpop.f32.mrb[0].mxu0
  %v589 = vadd.f32 0.0, %v588
  %v590 = vpop.f32.mrb[0].mxu0
  %591 = vmatprep.mubr.f32.mxu0 0.0
  %592 = vmatmul.mubr.f32.gmra.mrb[0].mxu0 %v494
  %v593 = vpop.f32.mrb[0].mxu0
  %v594 = vadd.f32 0.0, %v593
  %v595 = vpop.f32.mrb[0].mxu0
  %596 = vmatprep.mubr.f32.mxu0 0.0
  %597 = vmatmul.mubr.f32.gmra.mrb[0].mxu0 %v497
  %v598 = vpop.f32.mrb[0].mxu0
  %v599 = vadd.f32 0.0, %v598
  %v600 = vpop.f32.mrb[0].mxu0
  %601 = vdwg.mxu0
  %s602 = smul.u32 0, 48
  %v603 = vlaneseq
  %v604 = vand.u32 %v603, 127
  %v605 = vstv %s602
  %v606 = vadd.s32 %v605, %v604
  %v607 = vld [vmem:[#allocation3] sm:$0xff]
  %v608 = vld [vmem:[#allocation3 + $0x8] sm:$0xff]
  %v609 = vld [vmem:[#allocation3 + $0x10] sm:$0xff]
  %v610 = vld [vmem:[#allocation3 + $0x18] sm:$0xff]
  %v611 = vld [vmem:[#allocation3 + $0x20] sm:$0xff]
  %v612 = vld [vmem:[#allocation3 + $0x28] sm:$0xff]
  %v613 = vld [vmem:[#allocation3 + $0x30] sm:$0xff]
  %v614 = vld [vmem:[#allocation3 + $0x38] sm:$0xff]
  %623 = vrot.lane.b32.xlu0 %v469, 15
  %v624 = vpop.permute.xlu0 %623
  %625 = vrot.lane.b32.xlu0 %v474, 15
  %v626 = vpop.permute.xlu0 %625
  %627 = vrot.lane.b32.xlu0 %v479, 15
  %v628 = vpop.permute.xlu0 %627
  %629 = vrot.lane.b32.xlu0 %v484, 15
  %v630 = vpop.permute.xlu0 %629
  %631 = vrot.lane.b32.xlu0 %v584, 15
  %v632 = vpop.permute.xlu0 %631
  %633 = vrot.lane.b32.xlu0 %v589, 15
  %v634 = vpop.permute.xlu0 %633
  %635 = vrot.lane.b32.xlu0 %v594, 15
  %v636 = vpop.permute.xlu0 %635
  %637 = vrot.lane.b32.xlu0 %v599, 15
  %v638 = vpop.permute.xlu0 %637
  %vm647 = vcmask 121856
  %v648 = vsel %vm647, %v607, %v624
  %v649 = vsel %vm647, %v608, %v626
  %v650 = vsel %vm647, %v609, %v628
  %v651 = vsel %vm647, %v610, %v630
  %v652 = vsel %vm647, %v611, %v632
  %v653 = vsel %vm647, %v612, %v634
  %v654 = vsel %vm647, %v613, %v636
  %v655 = vsel %vm647, %v614, %v638
  %v656 = vld [vmem:[#allocation4] sm:$0xff]
  %v657 = vld [vmem:[#allocation4 + $0x8] sm:$0xff]
  %v658 = vld [vmem:[#allocation4 + $0x10] sm:$0xff]
  %v659 = vld [vmem:[#allocation4 + $0x18] sm:$0xff]
  %v660 = vld [vmem:[#allocation4 + $0x20] sm:$0xff]
  %v661 = vld [vmem:[#allocation4 + $0x28] sm:$0xff]
  %v662 = vld [vmem:[#allocation4 + $0x30] sm:$0xff]
  %v663 = vld [vmem:[#allocation4 + $0x38] sm:$0xff]
  %664 = vrot.lane.b32.xlu0 %v606, 15
  %v665 = vpop.permute.xlu0 %664
  %v666 = vsel %vm647, %v656, %v665
  %v667 = vsel %vm647, %v657, %v665
  %v668 = vsel %vm647, %v658, %v665
  %v669 = vsel %vm647, %v659, %v665
  %v670 = vsel %vm647, %v660, %v665
  %v671 = vsel %vm647, %v661, %v665
  %v672 = vsel %vm647, %v662, %v665
  %v673 = vsel %vm647, %v663, %v665
  loop: start=0, step=1, limit=15
  $region14: #{tpu_custom_call.1} parent=0 // loop_pre_header
    _
  $region15: #{tpu_custom_call.1} parent=0 // loop_header
    %s675 = sphi 0, %s679
    %p676 = scmp.ge.s32.totalorder %s675, 15
    %v680 = vphi %v648, %v891
    %v681 = vphi %v649, %v892
    %v682 = vphi %v650, %v893
    %v683 = vphi %v651, %v894
    %v684 = vphi %v652, %v895
    %v685 = vphi %v653, %v896
    %v686 = vphi %v654, %v897
    %v687 = vphi %v655, %v898
    %v688 = vphi 0.0, %v867
    %v689 = vphi 0.0, %v868
    %v690 = vphi 0.0, %v869
    %v691 = vphi 0.0, %v870
    %v692 = vphi 0.0, %v871
    %v693 = vphi 0.0, %v872
    %v694 = vphi 0.0, %v873
    %v695 = vphi 0.0, %v874
    %v696 = vphi 0, %v875
    %v697 = vphi 0, %v876
    %v698 = vphi 0, %v877
    %v699 = vphi 0, %v878
    %v700 = vphi 0, %v879
    %v701 = vphi 0, %v880
    %v702 = vphi 0, %v881
    %v703 = vphi 0, %v882
  $region16: #{tpu_custom_call.1} parent=0 // loop_header_branch
    %678 = sbr.rel (%p676) target = $region20
  $region17: #{tpu_custom_call.1} parent=0 // loop_body
    %vm704 = vcmask 515072
    %v705 = vsel %vm704, %v680, -inf
    %706 = vmax.xlane.f32.xlu0 %v705
    %v707 = vpop.xlane.xlu0 %706
    %v708 = vsel %vm704, %v681, -inf
    %709 = vmax.xlane.f32.xlu0 %v708
    %v710 = vpop.xlane.xlu0 %709
    %v711 = vsel %vm704, %v682, -inf
    %712 = vmax.xlane.f32.xlu0 %v711
    %v713 = vpop.xlane.xlu0 %712
    %v714 = vsel %vm704, %v683, -inf
    %715 = vmax.xlane.f32.xlu0 %v714
    %v716 = vpop.xlane.xlu0 %715
    %v717 = vsel %vm704, %v684, -inf
    %718 = vmax.xlane.f32.xlu0 %v717
    %v719 = vpop.xlane.xlu0 %718
    %v720 = vsel %vm704, %v685, -inf
    %721 = vmax.xlane.f32.xlu0 %v720
    %v722 = vpop.xlane.xlu0 %721
    %v723 = vsel %vm704, %v686, -inf
    %724 = vmax.xlane.f32.xlu0 %v723
    %v725 = vpop.xlane.xlu0 %724
    %v726 = vsel %vm704, %v687, -inf
    %727 = vmax.xlane.f32.xlu0 %v726
    %v728 = vpop.xlane.xlu0 %727
    %vm729 = vcmp.eq.f32.partialorder %v680, %v707
    %vm730 = vcmp.eq.f32.partialorder %v681, %v710
    %vm731 = vcmp.eq.f32.partialorder %v682, %v713
    %vm732 = vcmp.eq.f32.partialorder %v683, %v716
    %vm733 = vcmp.eq.f32.partialorder %v684, %v719
    %vm734 = vcmp.eq.f32.partialorder %v685, %v722
    %vm735 = vcmp.eq.f32.partialorder %v686, %v725
    %vm736 = vcmp.eq.f32.partialorder %v687, %v728
    %v737 = vsel %vm729, %v666, 2147483647
    %v738 = vsel %vm730, %v667, 2147483647
    %v739 = vsel %vm731, %v668, 2147483647
    %v740 = vsel %vm732, %v669, 2147483647
    %v741 = vsel %vm733, %v670, 2147483647
    %v742 = vsel %vm734, %v671, 2147483647
    %v743 = vsel %vm735, %v672, 2147483647
    %v744 = vsel %vm736, %v673, 2147483647
    %v745 = vsel %vm704, %v737, 2147483647
    %v746 = vand.u32 %v745, 65535
    %v747 = vshra.s32 %v745, 16
    %v748 = vcvt.s32.f32 %v746
    %v749 = vcvt.s32.f32 %v747
    %750 = vmin.xlane.f32.xlu0 %v749
    %v751 = vpop.xlane.xlu0 %750
    %vm752 = vcmp.eq.f32.partialorder %v749, %v751
    %v753 = vsel %vm752, %v748, inf
    %754 = vmin.xlane.f32.xlu0 %v753
    %v755 = vpop.xlane.xlu0 %754
    %v756 = vcvt.f32.s32 %v755
    %v757 = vcvt.f32.s32 %v751
    %v758 = vshll.u32 %v757, 16
    %v759 = vadd.s32 %v758, %v756
    %v760 = vsel %vm704, %v738, 2147483647
    %v761 = vand.u32 %v760, 65535
    %v762 = vshra.s32 %v760, 16
    %v763 = vcvt.s32.f32 %v761
    %v764 = vcvt.s32.f32 %v762
    %765 = vmin.xlane.f32.xlu0 %v764
    %v766 = vpop.xlane.xlu0 %765
    %vm767 = vcmp.eq.f32.partialorder %v764, %v766
    %v768 = vsel %vm767, %v763, inf
    %769 = vmin.xlane.f32.xlu0 %v768
    %v770 = vpop.xlane.xlu0 %769
    %v771 = vcvt.f32.s32 %v770
    %v772 = vcvt.f32.s32 %v766
    %v773 = vshll.u32 %v772, 16
    %v774 = vadd.s32 %v773, %v771
    %v775 = vsel %vm704, %v739, 2147483647
    %v776 = vand.u32 %v775, 65535
    %v777 = vshra.s32 %v775, 16
    %v778 = vcvt.s32.f32 %v776
    %v779 = vcvt.s32.f32 %v777
    %780 = vmin.xlane.f32.xlu0 %v779
    %v781 = vpop.xlane.xlu0 %780
    %vm782 = vcmp.eq.f32.partialorder %v779, %v781
    %v783 = vsel %vm782, %v778, inf
    %784 = vmin.xlane.f32.xlu0 %v783
    %v785 = vpop.xlane.xlu0 %784
    %v786 = vcvt.f32.s32 %v785
    %v787 = vcvt.f32.s32 %v781
    %v788 = vshll.u32 %v787, 16
    %v789 = vadd.s32 %v788, %v786
    %v790 = vsel %vm704, %v740, 2147483647
    %v791 = vand.u32 %v790, 65535
    %v792 = vshra.s32 %v790, 16
    %v793 = vcvt.s32.f32 %v791
    %v794 = vcvt.s32.f32 %v792
    %795 = vmin.xlane.f32.xlu0 %v794
    %v796 = vpop.xlane.xlu0 %795
    %vm797 = vcmp.eq.f32.partialorder %v794, %v796
    %v798 = vsel %vm797, %v793, inf
    %799 = vmin.xlane.f32.xlu0 %v798
    %v800 = vpop.xlane.xlu0 %799
    %v801 = vcvt.f32.s32 %v800
    %v802 = vcvt.f32.s32 %v796
    %v803 = vshll.u32 %v802, 16
    %v804 = vadd.s32 %v803, %v801
    %v805 = vsel %vm704, %v741, 2147483647
    %v806 = vand.u32 %v805, 65535
    %v807 = vshra.s32 %v805, 16
    %v808 = vcvt.s32.f32 %v806
    %v809 = vcvt.s32.f32 %v807
    %810 = vmin.xlane.f32.xlu0 %v809
    %v811 = vpop.xlane.xlu0 %810
    %vm812 = vcmp.eq.f32.partialorder %v809, %v811
    %v813 = vsel %vm812, %v808, inf
    %814 = vmin.xlane.f32.xlu0 %v813
    %v815 = vpop.xlane.xlu0 %814
    %v816 = vcvt.f32.s32 %v815
    %v817 = vcvt.f32.s32 %v811
    %v818 = vshll.u32 %v817, 16
    %v819 = vadd.s32 %v818, %v816
    %v820 = vsel %vm704, %v742, 2147483647
    %v821 = vand.u32 %v820, 65535
    %v822 = vshra.s32 %v820, 16
    %v823 = vcvt.s32.f32 %v821
    %v824 = vcvt.s32.f32 %v822
    %825 = vmin.xlane.f32.xlu0 %v824
    %v826 = vpop.xlane.xlu0 %825
    %vm827 = vcmp.eq.f32.partialorder %v824, %v826
    %v828 = vsel %vm827, %v823, inf
    %829 = vmin.xlane.f32.xlu0 %v828
    %v830 = vpop.xlane.xlu0 %829
    %v831 = vcvt.f32.s32 %v830
    %v832 = vcvt.f32.s32 %v826
    %v833 = vshll.u32 %v832, 16
    %v834 = vadd.s32 %v833, %v831
    %v835 = vsel %vm704, %v743, 2147483647
    %v836 = vand.u32 %v835, 65535
    %v837 = vshra.s32 %v835, 16
    %v838 = vcvt.s32.f32 %v836
    %v839 = vcvt.s32.f32 %v837
    %840 = vmin.xlane.f32.xlu0 %v839
    %v841 = vpop.xlane.xlu0 %840
    %vm842 = vcmp.eq.f32.partialorder %v839, %v841
    %v843 = vsel %vm842, %v838, inf
    %844 = vmin.xlane.f32.xlu0 %v843
    %v845 = vpop.xlane.xlu0 %844
    %v846 = vcvt.f32.s32 %v845
    %v847 = vcvt.f32.s32 %v841
    %v848 = vshll.u32 %v847, 16
    %v849 = vadd.s32 %v848, %v846
    %v850 = vsel %vm704, %v744, 2147483647
    %v851 = vand.u32 %v850, 65535
    %v852 = vshra.s32 %v850, 16
    %v853 = vcvt.s32.f32 %v851
    %v854 = vcvt.s32.f32 %v852
    %855 = vmin.xlane.f32.xlu0 %v854
    %v856 = vpop.xlane.xlu0 %855
    %vm857 = vcmp.eq.f32.partialorder %v854, %v856
    %v858 = vsel %vm857, %v853, inf
    %859 = vmin.xlane.f32.xlu0 %v858
    %v860 = vpop.xlane.xlu0 %859
    %v861 = vcvt.f32.s32 %v860
    %v862 = vcvt.f32.s32 %v856
    %v863 = vshll.u32 %v862, 16
    %v864 = vadd.s32 %v863, %v861
    %v865 = vstv %s675
    %vm866 = vcmp.eq.s32.totalorder %v604, %v865
    %v867 = vsel %vm866, %v707, %v688
    %v868 = vsel %vm866, %v710, %v689
    %v869 = vsel %vm866, %v713, %v690
    %v870 = vsel %vm866, %v716, %v691
    %v871 = vsel %vm866, %v719, %v692
    %v872 = vsel %vm866, %v722, %v693
    %v873 = vsel %vm866, %v725, %v694
    %v874 = vsel %vm866, %v728, %v695
    %v875 = vsel %vm866, %v759, %v696
    %v876 = vsel %vm866, %v774, %v697
    %v877 = vsel %vm866, %v789, %v698
    %v878 = vsel %vm866, %v804, %v699
    %v879 = vsel %vm866, %v819, %v700
    %v880 = vsel %vm866, %v834, %v701
    %v881 = vsel %vm866, %v849, %v702
    %v882 = vsel %vm866, %v864, %v703
    %vm883 = vcmp.eq.s32.totalorder %v666, %v759
    %vm884 = vcmp.eq.s32.totalorder %v667, %v774
    %vm885 = vcmp.eq.s32.totalorder %v668, %v789
    %vm886 = vcmp.eq.s32.totalorder %v669, %v804
    %vm887 = vcmp.eq.s32.totalorder %v670, %v819
    %vm888 = vcmp.eq.s32.totalorder %v671, %v834
    %vm889 = vcmp.eq.s32.totalorder %v672, %v849
    %vm890 = vcmp.eq.s32.totalorder %v673, %v864
    %v891 = vsel %vm883, -inf, %v680
    %v892 = vsel %vm884, -inf, %v681
    %v893 = vsel %vm885, -inf, %v682
    %v894 = vsel %vm886, -inf, %v683
    %v895 = vsel %vm887, -inf, %v684
    %v896 = vsel %vm888, -inf, %v685
    %v897 = vsel %vm889, -inf, %v686
    %v898 = vsel %vm890, -inf, %v687
  $region18: #{tpu_custom_call.1} parent=0 // loop_footer
    %s679 = sadd.s32 1, %s675
  $region19: #{tpu_custom_call.1} parent=0 // loop_footer_branch
    %674 = sbr.rel target = $region15
  $region20: #{tpu_custom_call.1} parent=0 // loop_exit
    _
  // Predicated region
  $region21: #{tpu_custom_call.1} parent=0 // pred_check
    %p899 = pneg %p13
  $region22: #{tpu_custom_call.1} parent=0 // pred_check_branch
    %901 = sbr.rel (%p899) target = $region24
  $region23: #{tpu_custom_call.1} parent=0 // pred_region
    %v902 = vsel %vm647, %v688, -inf
    %903 = vmax.xlane.f32.xlu0 %v902
    %v904 = vpop.xlane.xlu0 %903
    %v905 = vsel %vm647, %v689, -inf
    %906 = vmax.xlane.f32.xlu0 %v905
    %v907 = vpop.xlane.xlu0 %906
    %v908 = vsel %vm647, %v690, -inf
    %909 = vmax.xlane.f32.xlu0 %v908
    %v910 = vpop.xlane.xlu0 %909
    %v911 = vsel %vm647, %v691, -inf
    %912 = vmax.xlane.f32.xlu0 %v911
    %v913 = vpop.xlane.xlu0 %912
    %v914 = vsel %vm647, %v692, -inf
    %915 = vmax.xlane.f32.xlu0 %v914
    %v916 = vpop.xlane.xlu0 %915
    %v917 = vsel %vm647, %v693, -inf
    %918 = vmax.xlane.f32.xlu0 %v917
    %v919 = vpop.xlane.xlu0 %918
    %v920 = vsel %vm647, %v694, -inf
    %921 = vmax.xlane.f32.xlu0 %v920
    %v922 = vpop.xlane.xlu0 %921
    %v923 = vsel %vm647, %v695, -inf
    %924 = vmax.xlane.f32.xlu0 %v923
    %v925 = vpop.xlane.xlu0 %924
    %v926 = vsub.f32 %v688, %v904
    %v927 = vsub.f32 %v689, %v907
    %v928 = vsub.f32 %v690, %v910
    %v929 = vsub.f32 %v691, %v913
    %v930 = vsub.f32 %v692, %v916
    %v931 = vsub.f32 %v693, %v919
    %v932 = vsub.f32 %v694, %v922
    %v933 = vsub.f32 %v695, %v925
    %v934 = vmul.f32 %v926, 1.442695
    %v935 = vpow.pop %v934
    %v936 = vmul.f32 %v927, 1.442695
    %v937 = vpow.pop %v936
    %v938 = vmul.f32 %v928, 1.442695
    %v939 = vpow.pop %v938
    %v940 = vmul.f32 %v929, 1.442695
    %v941 = vpow.pop %v940
    %v942 = vmul.f32 %v930, 1.442695
    %v943 = vpow.pop %v942
    %v944 = vmul.f32 %v931, 1.442695
    %v945 = vpow.pop %v944
    %v946 = vmul.f32 %v932, 1.442695
    %v947 = vpow.pop %v946
    %v948 = vmul.f32 %v933, 1.442695
    %v949 = vpow.pop %v948
    %v950 = vsel %vm647, %v935, 0.0
    %951 = vadd.xlane.f32.xlu0 %v950
    %v952 = vpop.xlane.xlu0 %951
    %v953 = vsel %vm647, %v937, 0.0
    %954 = vadd.xlane.f32.xlu0 %v953
    %v955 = vpop.xlane.xlu0 %954
    %v956 = vsel %vm647, %v939, 0.0
    %957 = vadd.xlane.f32.xlu0 %v956
    %v958 = vpop.xlane.xlu0 %957
    %v959 = vsel %vm647, %v941, 0.0
    %960 = vadd.xlane.f32.xlu0 %v959
    %v961 = vpop.xlane.xlu0 %960
    %v962 = vsel %vm647, %v943, 0.0
    %963 = vadd.xlane.f32.xlu0 %v962
    %v964 = vpop.xlane.xlu0 %963
    %v965 = vsel %vm647, %v945, 0.0
    %966 = vadd.xlane.f32.xlu0 %v965
    %v967 = vpop.xlane.xlu0 %966
    %v968 = vsel %vm647, %v947, 0.0
    %969 = vadd.xlane.f32.xlu0 %v968
    %v970 = vpop.xlane.xlu0 %969
    %v971 = vsel %vm647, %v949, 0.0
    %972 = vadd.xlane.f32.xlu0 %v971
    %v973 = vpop.xlane.xlu0 %972
    %v974 = vrcp.pop %v952
    %v975 = vmul.f32 1.0, %v974
    %v976 = vrcp.pop %v955
    %v977 = vmul.f32 1.0, %v976
    %v978 = vrcp.pop %v958
    %v979 = vmul.f32 1.0, %v978
    %v980 = vrcp.pop %v961
    %v981 = vmul.f32 1.0, %v980
    %v982 = vrcp.pop %v964
    %v983 = vmul.f32 1.0, %v982
    %v984 = vrcp.pop %v967
    %v985 = vmul.f32 1.0, %v984
    %v986 = vrcp.pop %v970
    %v987 = vmul.f32 1.0, %v986
    %v988 = vrcp.pop %v973
    %v989 = vmul.f32 1.0, %v988
    %v990 = vmul.f32 %v935, %v975
    %v991 = vmul.f32 %v937, %v977
    %v992 = vmul.f32 %v939, %v979
    %v993 = vmul.f32 %v941, %v981
    %v994 = vmul.f32 %v943, %v983
    %v995 = vmul.f32 %v945, %v985
    %v996 = vmul.f32 %v947, %v987
    %v997 = vmul.f32 %v949, %v989
    %998 = vst.msk [vmem:[%s2] sm:$0xff] %vm647, %v990
    %999 = vst.msk [vmem:[%s2 + $0x8] sm:$0xff] %vm647, %v991
    %1000 = vst.msk [vmem:[%s2 + $0x10] sm:$0xff] %vm647, %v992
    %1001 = vst.msk [vmem:[%s2 + $0x18] sm:$0xff] %vm647, %v993
    %1002 = vst.msk [vmem:[%s2 + $0x20] sm:$0xff] %vm647, %v994
    %1003 = vst.msk [vmem:[%s2 + $0x28] sm:$0xff] %vm647, %v995
    %1004 = vst.msk [vmem:[%s2 + $0x30] sm:$0xff] %vm647, %v996
    %1005 = vst.msk [vmem:[%s2 + $0x38] sm:$0xff] %vm647, %v997
    %1006 = vst.msk [vmem:[%s3] sm:$0xff] %vm647, %v696
    %1007 = vst.msk [vmem:[%s3 + $0x8] sm:$0xff] %vm647, %v697
    %1008 = vst.msk [vmem:[%s3 + $0x10] sm:$0xff] %vm647, %v698
    %1009 = vst.msk [vmem:[%s3 + $0x18] sm:$0xff] %vm647, %v699
    %1010 = vst.msk [vmem:[%s3 + $0x20] sm:$0xff] %vm647, %v700
    %1011 = vst.msk [vmem:[%s3 + $0x28] sm:$0xff] %vm647, %v701
    %1012 = vst.msk [vmem:[%s3 + $0x30] sm:$0xff] %vm647, %v702
    %1013 = vst.msk [vmem:[%s3 + $0x38] sm:$0xff] %vm647, %v703
  $region24: #{tpu_custom_call.1} parent=0 // pred_fallthru
    _
  // Predicated region
  $region25: #{tpu_custom_call.1} parent=0 // pred_check
    _
  $region26: #{tpu_custom_call.1} parent=0 // pred_check_branch
    %1015 = sbr.rel (0) target = $region28
  $region27: #{tpu_custom_call.1} parent=0 // pred_region
    _
  $region28: #{tpu_custom_call.1} parent=0 // pred_fallthru
    _
  // Predicated region
  $region29: #{tpu_custom_call.1} parent=0 // pred_check
    _
  $region30: #{tpu_custom_call.1} parent=0 // pred_check_branch
    %1017 = sbr.rel (0) target = $region32
  $region31: #{tpu_custom_call.1} parent=0 // pred_region
    _
  $region32: #{tpu_custom_call.1} parent=0 // pred_fallthru
    _
  // Predicated region
  $region33: #{tpu_custom_call.1} parent=0 // pred_check
    _
  $region34: #{tpu_custom_call.1} parent=0 // pred_check_branch
    %1019 = sbr.rel (0) target = $region36
  $region35: #{tpu_custom_call.1} parent=0 // pred_region
    _
  $region36: #{tpu_custom_call.1} parent=0 // pred_fallthru
    _
  // Predicated region
  $region37: #{tpu_custom_call.1} parent=0 // pred_check
    _
  $region38: #{tpu_custom_call.1} parent=0 // pred_check_branch
    %1021 = sbr.rel (0) target = $region40
  $region39: #{tpu_custom_call.1} parent=0 // pred_region
    _
  $region40: #{tpu_custom_call.1} parent=0 // pred_fallthru
    _

</llo_original>
